<compile_context>
chip_gen: v5e
topology: v5e:2x2
jax: 0.10.0
libtpu: 0.0.40
codegen_flags: <defaults>
</compile_context>

<pallas_src>
import jax
import jax.numpy as jnp
from jax.experimental import pallas as pl
from jax.experimental.pallas import tpu as pltpu

BN_EPS = 1e-5


def _round_up(a, b):
    return ((a + b - 1) // b) * b


def _cdiv(a, b):
    return (a + b - 1) // b


# ---------------------------------------------------------------------------
# Kernel: x tile (F_in, tb) -> output tile (1, tb).  Batch lives on the lane
# axis everywhere, so every matmul is a natural MXU dot and every store is
# lane-dense.
# ---------------------------------------------------------------------------
def station_mlp_kernel(x_ref, w1t_ref, b1_ref, w2t_ref, b2_ref, w3t_ref,
                       b3_ref, o_ref):
    xt = x_ref[...]                                            # (F_in, tb)

    # Linear(input_size, 32) + ReLU                    -> (32, tb)
    h = jnp.dot(w1t_ref[...], xt, preferred_element_type=jnp.float32)
    h = jnp.maximum(h + b1_ref[...], 0.0)

    # [BN1 folded in] Linear(32, 16) + ReLU            -> (16, tb)
    h = jnp.dot(w2t_ref[...], h, preferred_element_type=jnp.float32)
    h = jnp.maximum(h + b2_ref[...], 0.0)

    # [BN2 folded in] Linear(16, 1)                    -> (1, tb)
    out = jnp.dot(w3t_ref[...], h, preferred_element_type=jnp.float32)
    o_ref[...] = (out + b3_ref[...]).astype(o_ref.dtype)


# ---------------------------------------------------------------------------
# Wrapper
# ---------------------------------------------------------------------------
def station_model_forward(x, kernel_params, *, tile_batch=32768):
    """x: (N, input_size) f32 -> (N, 1) f32.  kernel_params from fold_params()."""
    N, F_in = x.shape
    w1t, b1c, w2t, b2c, w3t, b3c = kernel_params

    # ---- batch-tile sizing --------------------------------------------------
    # Cap the tile so double-buffered x + out stays well under every
    # generation's VMEM (v7x has only 64 MiB physical / 32 MiB scoped default).
    vmem_budget = 24 * 1024 * 1024
    tb_cap = max(128, (vmem_budget // (2 * (F_in + 1) * 4)) // 128 * 128)

    tb = max(128, (int(tile_batch) // 128) * 128)
    tb = min(tb, tb_cap, _round_up(N, 128))

    ntiles = _cdiv(N, tb)
    if ntiles == 1:
        if N >= 4096:        # split so v7x's two TensorCores both get a big tile;
            ntiles = 2       # on 1-TC chips one extra ~0.35us step is noise.
    elif ntiles % 2:
        ntiles += 1          # even parallel grid -> balanced v7x megacore sharding
    tb = max(128, _round_up(_cdiv(N, ntiles), 128))
    grid_n = _cdiv(N, tb)    # ragged final block handled by Pallas (no jnp.pad)

    # Feature-major x so the kernel tile is lane-dense (batch on lanes).
    # TODO(synk): have the upstream producer emit x feature-major so this
    # transpose is fused upstream instead of costing an extra HBM pass here.
    x_t = x.T                                                  # (F_in, N)

    def full_spec(a):
        # Parameters are tiny: whole array resident, same block every step.
        return pl.BlockSpec(a.shape, lambda i: (0, 0))

    out = pl.pallas_call(
        station_mlp_kernel,
        out_shape=jax.ShapeDtypeStruct((1, N), jnp.float32),
        grid_spec=pltpu.PrefetchScalarGridSpec(
            num_scalar_prefetch=0,
            grid=(grid_n,),
            in_specs=[
                pl.BlockSpec((F_in, tb), lambda i: (0, i)),    # x tile
                full_spec(w1t), full_spec(b1c),
                full_spec(w2t), full_spec(b2c),
                full_spec(w3t), full_spec(b3c),
            ],
            out_specs=pl.BlockSpec((1, tb), lambda i: (0, i)),
        ),
        compiler_params=pltpu.CompilerParams(
            dimension_semantics=("parallel",),
            vmem_limit_bytes=32 * 1024 * 1024,
        ),
    )(x_t, w1t, b1c, w2t, b2c, w3t, b3c)

    # (1, N) -> (N, 1)
    return out.reshape(N, 1)


# ---------------------------------------------------------------------------
# Parameters: raw (PyTorch-like) params, host-side BN folding, JAX reference.
# ---------------------------------------------------------------------------
def init_raw_params(key, input_size):
    """Synthetic params matching StationModel's shapes (Linear W stored (in,out))."""
    ks = jax.random.split(key, 8)

    def lin(kw, kb, fin, fout):
        bound = 1.0 / (fin ** 0.5)
        w = jax.random.uniform(kw, (fin, fout), jnp.float32, -bound, bound)
        b = jax.random.uniform(kb, (fout,), jnp.float32, -bound, bound)
        return w, b

    w1, b1 = lin(ks[0], ks[1], input_size, 32)
    w2, b2 = lin(ks[2], ks[3], 32, 16)
    w3, b3 = lin(ks[4], ks[5], 16, 1)

    # BatchNorm1d(32): gamma, beta, running_mean, running_var (perturbed so the
    # BN math is exercised, not a no-op).
    g1 = jnp.ones((32,), jnp.float32) + 0.1 * jax.random.normal(ks[6], (32,))
    be1 = 0.05 * jax.random.normal(ks[7], (32,), jnp.float32)
    m1 = 0.01 * jnp.arange(32, dtype=jnp.float32)
    v1 = jnp.ones((32,), jnp.float32) + 0.02 * jnp.arange(32, dtype=jnp.float32)

    # BatchNorm1d(16)
    g2 = jnp.ones((16,), jnp.float32) * 0.9
    be2 = jnp.full((16,), 0.03, jnp.float32)
    m2 = -0.01 * jnp.arange(16, dtype=jnp.float32)
    v2 = jnp.ones((16,), jnp.float32) + 0.01 * jnp.arange(16, dtype=jnp.float32)

    return (w1, b1, g1, be1, m1, v1,
            w2, b2, g2, be2, m2, v2,
            w3, b3)


def fold_params(raw):
    """Fold inference-mode BN into the following Linear (f32) and transpose
    everything into the kernel's (out_features, in_features) layout with
    column biases for lane-broadcasting."""
    (w1, b1, g1, be1, m1, v1,
     w2, b2, g2, be2, m2, v2,
     w3, b3) = raw

    s1 = g1 * jax.lax.rsqrt(v1 + BN_EPS)          # (32,)
    t1 = be1 - m1 * s1
    w2f = w2 * s1[:, None]                        # (32, 16)
    b2f = t1 @ w2 + b2                            # (16,)

    s2 = g2 * jax.lax.rsqrt(v2 + BN_EPS)          # (16,)
    t2 = be2 - m2 * s2
    w3f = w3 * s2[:, None]                        # (16, 1)
    b3f = t2 @ w3 + b3                            # (1,)

    return (w1.T, b1.reshape(-1, 1),              # (32,F_in), (32,1)
            w2f.T, b2f.reshape(-1, 1),            # (16,32),   (16,1)
            w3f.T, b3f.reshape(-1, 1))            # (1,16),    (1,1)


def reference_forward(x, raw):
    """Plain-JAX reference of the original (inference-mode) module."""
    (w1, b1, g1, be1, m1, v1,
     w2, b2, g2, be2, m2, v2,
     w3, b3) = raw
    h = jnp.maximum(x @ w1 + b1, 0.0)
    h = (h - m1) * g1 / jnp.sqrt(v1 + BN_EPS) + be1
    h = jnp.maximum(h @ w2 + b2, 0.0)
    h = (h - m2) * g2 / jnp.sqrt(v2 + BN_EPS) + be2
    return h @ w3 + b3


if __name__ == "__main__":
    key = jax.random.PRNGKey(0)
    k1, k2, k_params = jax.random.split(key, 3)

    input_size = 16
    raw_params = init_raw_params(k_params, input_size)
    kernel_params = fold_params(raw_params)

    # Case 1: N not a multiple of 128 -> single ragged block, grid of 1.
    x1 = jax.random.normal(k1, (300, input_size), jnp.float32)
    out1 = jax.block_until_ready(station_model_forward(x1, kernel_params))
    ref1 = reference_forward(x1, raw_params)
    assert out1.shape == (300, 1)
    assert jnp.allclose(out1, ref1, atol=1e-4, rtol=1e-4), "case1 mismatch"

    # Case 2: small tile forces a multi-step parallel grid (even # of steps)
    # with a ragged final block and no host-side padding.
    x2 = jax.random.normal(k2, (1000, input_size), jnp.float32)
    out2 = jax.block_until_ready(
        station_model_forward(x2, kernel_params, tile_batch=256))
    ref2 = reference_forward(x2, raw_params)
    assert out2.shape == (1000, 1)
    assert jnp.allclose(out2, ref2, atol=1e-4, rtol=1e-4), "case2 mismatch"

    print("KERNEL_OK")
</pallas_src>

<mosaic_0001>
module attributes {stable_mosaic.version = 11 : i64} {
  func.func @station_mlp_kernel(%arg0: i32, %arg1: memref<16x384xf32, #tpu.memory_space<vmem>>, %arg2: memref<32x16xf32, #tpu.memory_space<vmem>>, %arg3: memref<32x1xf32, #tpu.memory_space<vmem>>, %arg4: memref<16x32xf32, #tpu.memory_space<vmem>>, %arg5: memref<16x1xf32, #tpu.memory_space<vmem>>, %arg6: memref<1x16xf32, #tpu.memory_space<vmem>>, %arg7: memref<1x1xf32, #tpu.memory_space<vmem>>, %arg8: memref<1x384xf32, #tpu.memory_space<vmem>>) attributes {dimension_semantics = [#tpu.dimension_semantics<parallel>], iteration_bounds = array<i64: 1>, scalar_prefetch = 0 : i64, scratch_operands = 0 : i64, tpu.core_type = #tpu.core_type<tc>, window_params = [{transform_indices = @transform_0, window_bounds = array<i64: 16, 384>}, {pipeline_mode = #tpu.pipeline_mode<synchronous>, transform_indices = @transform_1, window_bounds = array<i64: 32, 16>}, {pipeline_mode = #tpu.pipeline_mode<synchronous>, transform_indices = @transform_2, window_bounds = array<i64: 32, 1>}, {pipeline_mode = #tpu.pipeline_mode<synchronous>, transform_indices = @transform_3, window_bounds = array<i64: 16, 32>}, {pipeline_mode = #tpu.pipeline_mode<synchronous>, transform_indices = @transform_4, window_bounds = array<i64: 16, 1>}, {pipeline_mode = #tpu.pipeline_mode<synchronous>, transform_indices = @transform_5, window_bounds = array<i64: 1, 16>}, {pipeline_mode = #tpu.pipeline_mode<synchronous>, transform_indices = @transform_6, window_bounds = array<i64: 1, 1>}, {transform_indices = @transform_7, window_bounds = array<i64: 1, 384>}]} {
    %c0 = arith.constant 0 : index
    %c0_0 = arith.constant 0 : index
    %0 = vector.load %arg1[%c0, %c0_0] : memref<16x384xf32, #tpu.memory_space<vmem>>, vector<16x384xf32>
    %c0_1 = arith.constant 0 : index
    %c0_2 = arith.constant 0 : index
    %1 = vector.load %arg2[%c0_1, %c0_2] : memref<32x16xf32, #tpu.memory_space<vmem>>, vector<32x16xf32>
    %cst = arith.constant dense<0.000000e+00> : vector<32x384xf32>
    %2 = tpu.matmul %1, %0, %cst {dimension_numbers = #tpu.dot_dimension_numbers<[1], [0], [0], [1], [0, 0, 1, 1], [], []>} : vector<32x16xf32>, vector<16x384xf32>, vector<32x384xf32> -> vector<32x384xf32>
    %c0_3 = arith.constant 0 : index
    %c0_4 = arith.constant 0 : index
    %3 = vector.load %arg3[%c0_3, %c0_4] : memref<32x1xf32, #tpu.memory_space<vmem>>, vector<32x1xf32>
    %4 = vector.broadcast %3 : vector<32x1xf32> to vector<32x384xf32>
    %5 = arith.addf %2, %4 : vector<32x384xf32>
    %cst_5 = arith.constant 0.000000e+00 : f32
    %6 = vector.broadcast %cst_5 : f32 to vector<32x384xf32>
    %7 = arith.maximumf %5, %6 : vector<32x384xf32>
    %c0_6 = arith.constant 0 : index
    %c0_7 = arith.constant 0 : index
    %8 = vector.load %arg4[%c0_6, %c0_7] : memref<16x32xf32, #tpu.memory_space<vmem>>, vector<16x32xf32>
    %cst_8 = arith.constant dense<0.000000e+00> : vector<16x384xf32>
    %9 = tpu.matmul %8, %7, %cst_8 {dimension_numbers = #tpu.dot_dimension_numbers<[1], [0], [0], [1], [0, 0, 1, 1], [], []>} : vector<16x32xf32>, vector<32x384xf32>, vector<16x384xf32> -> vector<16x384xf32>
    %c0_9 = arith.constant 0 : index
    %c0_10 = arith.constant 0 : index
    %10 = vector.load %arg5[%c0_9, %c0_10] : memref<16x1xf32, #tpu.memory_space<vmem>>, vector<16x1xf32>
    %11 = vector.broadcast %10 : vector<16x1xf32> to vector<16x384xf32>
    %12 = arith.addf %9, %11 : vector<16x384xf32>
    %cst_11 = arith.constant 0.000000e+00 : f32
    %13 = vector.broadcast %cst_11 : f32 to vector<16x384xf32>
    %14 = arith.maximumf %12, %13 : vector<16x384xf32>
    %c0_12 = arith.constant 0 : index
    %c0_13 = arith.constant 0 : index
    %15 = vector.load %arg6[%c0_12, %c0_13] : memref<1x16xf32, #tpu.memory_space<vmem>>, vector<1x16xf32>
    %cst_14 = arith.constant dense<0.000000e+00> : vector<1x384xf32>
    %16 = tpu.matmul %15, %14, %cst_14 {dimension_numbers = #tpu.dot_dimension_numbers<[1], [0], [0], [1], [0, 0, 1, 1], [], []>} : vector<1x16xf32>, vector<16x384xf32>, vector<1x384xf32> -> vector<1x384xf32>
    %c0_15 = arith.constant 0 : index
    %c0_16 = arith.constant 0 : index
    %17 = vector.load %arg7[%c0_15, %c0_16] : memref<1x1xf32, #tpu.memory_space<vmem>>, vector<1x1xf32>
    %18 = vector.broadcast %17 : vector<1x1xf32> to vector<1x384xf32>
    %19 = arith.addf %16, %18 : vector<1x384xf32>
    %c0_17 = arith.constant 0 : index
    %c0_18 = arith.constant 0 : index
    %20 = vector.load %arg8[%c0_17, %c0_18] : memref<1x384xf32, #tpu.memory_space<vmem>>, vector<1x384xf32>
    tpu.vector_store %arg8[%c0_17, %c0_18], %19 {strides = array<i32>} : memref<1x384xf32, #tpu.memory_space<vmem>>, vector<1x384xf32>,
    return
  }
  func.func @transform_0(%arg0: i32) -> (i32, i32) {
    %c0_i32 = arith.constant 0 : i32
    %c0_i32_0 = arith.constant 0 : i32
    return %c0_i32, %arg0 : i32, i32
  }
  func.func @transform_1(%arg0: i32) -> (i32, i32) {
    %c0_i32 = arith.constant 0 : i32
    %c0_i32_0 = arith.constant 0 : i32
    %c0_i32_1 = arith.constant 0 : i32
    return %c0_i32, %c0_i32_0 : i32, i32
  }
  func.func @transform_2(%arg0: i32) -> (i32, i32) {
    %c0_i32 = arith.constant 0 : i32
    %c0_i32_0 = arith.constant 0 : i32
    %c0_i32_1 = arith.constant 0 : i32
    return %c0_i32, %c0_i32_0 : i32, i32
  }
  func.func @transform_3(%arg0: i32) -> (i32, i32) {
    %c0_i32 = arith.constant 0 : i32
    %c0_i32_0 = arith.constant 0 : i32
    %c0_i32_1 = arith.constant 0 : i32
    return %c0_i32, %c0_i32_0 : i32, i32
  }
  func.func @transform_4(%arg0: i32) -> (i32, i32) {
    %c0_i32 = arith.constant 0 : i32
    %c0_i32_0 = arith.constant 0 : i32
    %c0_i32_1 = arith.constant 0 : i32
    return %c0_i32, %c0_i32_0 : i32, i32
  }
  func.func @transform_5(%arg0: i32) -> (i32, i32) {
    %c0_i32 = arith.constant 0 : i32
    %c0_i32_0 = arith.constant 0 : i32
    %c0_i32_1 = arith.constant 0 : i32
    return %c0_i32, %c0_i32_0 : i32, i32
  }
  func.func @transform_6(%arg0: i32) -> (i32, i32) {
    %c0_i32 = arith.constant 0 : i32
    %c0_i32_0 = arith.constant 0 : i32
    %c0_i32_1 = arith.constant 0 : i32
    return %c0_i32, %c0_i32_0 : i32, i32
  }
  func.func @transform_7(%arg0: i32) -> (i32, i32) {
    %c0_i32 = arith.constant 0 : i32
    %c0_i32_0 = arith.constant 0 : i32
    return %c0_i32, %arg0 : i32, i32
  }
}

</mosaic_0001>

<llo_original>
// kernel: tpu_custom_call.1
$region0: #{tpu_custom_call.1}
  #allocation0 [shape = 'u32[]', space=smem, size = 0x4, offset = 0x4, fixed_abs, tag = 'smem constant byte address 0x4 - core index']
  #allocation1 [shape = 'u32[72,128]{1,0:T(1,128)}', space=vmem, size = 0x9000, scoped, tag = 'internal scratch']
  #allocation2 [shape = 'f32[1,1]{1,0:T(1,128)S(1)}', space=vmem, size = 0x200, scoped, tag = 'scoped memory for tpu_custom_call.1']
  %s0 = inlined_call_operand.vmem [shape: f32[16,300], index: 0, kind: input, shape index: {}]
  %s1 = inlined_call_operand.vmem [shape: f32[32,16], index: 1, kind: input, shape index: {}]
  %s2 = inlined_call_operand.vmem [shape: f32[32,1], index: 2, kind: input, shape index: {}]
  %s3 = inlined_call_operand.vmem [shape: f32[16,32], index: 3, kind: input, shape index: {}]
  %s4 = inlined_call_operand.vmem [shape: f32[16,1], index: 4, kind: input, shape index: {}]
  %s5 = inlined_call_operand.vmem [shape: f32[1,16], index: 5, kind: input, shape index: {}]
  %s6 = inlined_call_operand.<no memory space> [shape: f32[1,1], index: 6, kind: input, shape index: {}]
  %s7 = inlined_call_operand.hbm [shape: f32[1,300], index: 7, kind: output, shape index: {}]
  %s8 = sld [smem:[#allocation0]]
  $region38: #{tpu_custom_call.1} parent=0
    _
  %s10 = ssub.s32 1, %s8
  %s11 = scalar_select 0, %s10, %s8
  %v12 = vstv %s6
  %13 = vst [vmem:[#allocation2] sm:$0x1] %v12
  $region1: #{tpu_custom_call.1} parent=0
    #allocation3 [shape = 'u8[1536]{0}', space=vmem, size = 0x800, scoped, tag = 'output window, operand 0, single buffered']
    #allocation4 [shape = 's32[1]{0}', space=sflag, size = 0x4, scoped, tag = 'scoped memory for tpu_custom_call.1']
    %14 = vsyncpa [#allocation4], 0
    // Predicated region
    $region2: #{tpu_custom_call.1} parent=1 // pred_check
      _
    $region3: #{tpu_custom_call.1} parent=1 // pred_check_branch
      %16 = sbr.rel (0) target = $region5
    $region4: #{tpu_custom_call.1} parent=1 // pred_region
      _
    $region5: #{tpu_custom_call.1} parent=1 // pred_fallthru
      _
    // Predicated region
    $region6: #{tpu_custom_call.1} parent=1 // pred_check
      _
    $region7: #{tpu_custom_call.1} parent=1 // pred_check_branch
      %18 = sbr.rel (0) target = $region9
    $region8: #{tpu_custom_call.1} parent=1 // pred_region
      _
    $region9: #{tpu_custom_call.1} parent=1 // pred_fallthru
      _
    // Predicated region
    $region10: #{tpu_custom_call.1} parent=1 // pred_check
      _
    $region11: #{tpu_custom_call.1} parent=1 // pred_check_branch
      %20 = sbr.rel (0) target = $region13
    $region12: #{tpu_custom_call.1} parent=1 // pred_region
      _
    $region13: #{tpu_custom_call.1} parent=1 // pred_fallthru
      _
    // Predicated region
    $region14: #{tpu_custom_call.1} parent=1 // pred_check
      _
    $region15: #{tpu_custom_call.1} parent=1 // pred_check_branch
      %22 = sbr.rel (0) target = $region17
    $region16: #{tpu_custom_call.1} parent=1 // pred_region
      _
    $region17: #{tpu_custom_call.1} parent=1 // pred_fallthru
      _
    // Predicated region
    $region18: #{tpu_custom_call.1} parent=1 // pred_check
      _
    $region19: #{tpu_custom_call.1} parent=1 // pred_check_branch
      %24 = sbr.rel (0) target = $region21
    $region20: #{tpu_custom_call.1} parent=1 // pred_region
      _
    $region21: #{tpu_custom_call.1} parent=1 // pred_fallthru
      _
    // Predicated region
    $region22: #{tpu_custom_call.1} parent=1 // pred_check
      _
    $region23: #{tpu_custom_call.1} parent=1 // pred_check_branch
      %26 = sbr.rel (0) target = $region25
    $region24: #{tpu_custom_call.1} parent=1 // pred_region
      _
    $region25: #{tpu_custom_call.1} parent=1 // pred_fallthru
      _
    // Predicated region
    $region26: #{tpu_custom_call.1} parent=1 // pred_check
      _
    $region27: #{tpu_custom_call.1} parent=1 // pred_check_branch
      %28 = sbr.rel (0) target = $region29
    $region28: #{tpu_custom_call.1} parent=1 // pred_region
      _
    $region29: #{tpu_custom_call.1} parent=1 // pred_fallthru
      _
    %v29 = vld [vmem:[%s0] sm:$0xff]
    %v30 = vld [vmem:[%s0 + $0x8] sm:$0xff]
    %v31 = vld [vmem:[%s0 + $0x10] sm:$0xff]
    %v32 = vld [vmem:[%s0 + $0x18] sm:$0xff]
    %v33 = vld [vmem:[%s0 + $0x20] sm:$0xff]
    %v34 = vld [vmem:[%s0 + $0x28] sm:$0xff]
    %v35 = vld [vmem:[%s1] sm:$0xff]
    %v36 = vld [vmem:[%s1 + $0x8] sm:$0xff]
    %v37 = vld [vmem:[%s1 + $0x10] sm:$0xff]
    %v38 = vld [vmem:[%s1 + $0x18] sm:$0xff]
    %v39 = vld [vmem:[%s2] sm:$0xff]
    %v40 = vld [vmem:[%s2 + $0x8] sm:$0xff]
    %v41 = vld [vmem:[%s2 + $0x10] sm:$0xff]
    %v42 = vld [vmem:[%s2 + $0x18] sm:$0xff]
    %44 = vset.pattern.permute.xlu0 0
    %45 = vperm.xlu0 %44, %v39
    %v46 = vpop.permute.xlu0 %45
    %49 = vset.pattern.permute.xlu0 0
    %50 = vperm.xlu0 %49, %v40
    %v51 = vpop.permute.xlu0 %50
    %54 = vset.pattern.permute.xlu0 0
    %55 = vperm.xlu0 %54, %v41
    %v56 = vpop.permute.xlu0 %55
    %59 = vset.pattern.permute.xlu0 0
    %60 = vperm.xlu0 %59, %v42
    %v61 = vpop.permute.xlu0 %60
    %vm63 = vcmask 130048
    %v65 = vsel %vm63, %v35, 0
    %v68 = vsel %vm63, %v36, 0
    %v71 = vsel %vm63, %v37, 0
    %v74 = vsel %vm63, %v38, 0
    %76 = vmatpush.msra.mxu0 0.0
    %77 = vmatpush.msra.mxu0 0.0
    %78 = vmatpush.msra.mxu0 0.0
    %79 = vmatpush.msra.mxu0 0.0
    %80 = vmatpush.msra.mxu0 0.0
    %81 = vmatpush.msra.mxu0 0.0
    %82 = vmatpush.msra.mxu0 0.0
    %83 = vmatpush.msra.mxu0 0.0
    %84 = vmatpush.msra.mxu0 0.0
    %85 = vmatpush.msra.mxu0 0.0
    %86 = vmatpush.msra.mxu0 0.0
    %87 = vmatpush.msra.mxu0 0.0
    %88 = vmatpush.msra.mxu0 0.0
    %89 = vmatpush.msra.mxu0 0.0
    %90 = vmatpush.msra.mxu0 %v32
    %91 = vmatpush.msra.mxu0 %v29
    %92 = vmatmul.f32.gmra.mxu0 %v65
    %v93 = vpop.f32.mrf.mxu0
    %v94 = vadd.f32 %v46, %v93
    %95 = vmatmul.f32.gmra.mxu0 %v68
    %v96 = vpop.f32.mrf.mxu0
    %v97 = vadd.f32 %v51, %v96
    %98 = vmatmul.f32.gmra.mxu0 %v71
    %v99 = vpop.f32.mrf.mxu0
    %v100 = vadd.f32 %v56, %v99
    %101 = vmatmul.f32.gmra.mxu0 %v74
    %v102 = vpop.f32.mrf.mxu0
    %v103 = vadd.f32 %v61, %v102
    %104 = vdwg.mxu0
    %105 = vmatpush.msra.mxu0 0.0
    %106 = vmatpush.msra.mxu0 0.0
    %107 = vmatpush.msra.mxu0 0.0
    %108 = vmatpush.msra.mxu0 0.0
    %109 = vmatpush.msra.mxu0 0.0
    %110 = vmatpush.msra.mxu0 0.0
    %111 = vmatpush.msra.mxu0 0.0
    %112 = vmatpush.msra.mxu0 0.0
    %113 = vmatpush.msra.mxu0 0.0
    %114 = vmatpush.msra.mxu0 0.0
    %115 = vmatpush.msra.mxu0 0.0
    %116 = vmatpush.msra.mxu0 0.0
    %117 = vmatpush.msra.mxu0 0.0
    %118 = vmatpush.msra.mxu0 0.0
    %119 = vmatpush.msra.mxu0 %v33
    %120 = vmatpush.msra.mxu0 %v30
    %121 = vmatmul.f32.gmra.mxu0 %v65
    %v122 = vpop.f32.mrf.mxu0
    %v123 = vadd.f32 %v46, %v122
    %124 = vmatmul.f32.gmra.mxu0 %v68
    %v125 = vpop.f32.mrf.mxu0
    %v126 = vadd.f32 %v51, %v125
    %127 = vmatmul.f32.gmra.mxu0 %v71
    %v128 = vpop.f32.mrf.mxu0
    %v129 = vadd.f32 %v56, %v128
    %130 = vmatmul.f32.gmra.mxu0 %v74
    %v131 = vpop.f32.mrf.mxu0
    %v132 = vadd.f32 %v61, %v131
    %133 = vdwg.mxu0
    %134 = vmatpush.msra.mxu0 0.0
    %135 = vmatpush.msra.mxu0 0.0
    %136 = vmatpush.msra.mxu0 0.0
    %137 = vmatpush.msra.mxu0 0.0
    %138 = vmatpush.msra.mxu0 0.0
    %139 = vmatpush.msra.mxu0 0.0
    %140 = vmatpush.msra.mxu0 0.0
    %141 = vmatpush.msra.mxu0 0.0
    %142 = vmatpush.msra.mxu0 0.0
    %143 = vmatpush.msra.mxu0 0.0
    %144 = vmatpush.msra.mxu0 0.0
    %145 = vmatpush.msra.mxu0 0.0
    %146 = vmatpush.msra.mxu0 0.0
    %147 = vmatpush.msra.mxu0 0.0
    %148 = vmatpush.msra.mxu0 %v34
    %149 = vmatpush.msra.mxu0 %v31
    %150 = vmatmul.f32.gmra.mxu0 %v65
    %v151 = vpop.f32.mrf.mxu0
    %v152 = vadd.f32 %v46, %v151
    %153 = vmatmul.f32.gmra.mxu0 %v68
    %v154 = vpop.f32.mrf.mxu0
    %v155 = vadd.f32 %v51, %v154
    %156 = vmatmul.f32.gmra.mxu0 %v71
    %v157 = vpop.f32.mrf.mxu0
    %v158 = vadd.f32 %v56, %v157
    %159 = vmatmul.f32.gmra.mxu0 %v74
    %v160 = vpop.f32.mrf.mxu0
    %v161 = vadd.f32 %v61, %v160
    %162 = vdwg.mxu0
    %v163 = vmax.f32 %v94, 0.0
    %v164 = vmax.f32 %v123, 0.0
    %v165 = vmax.f32 %v152, 0.0
    %v166 = vmax.f32 %v97, 0.0
    %v167 = vmax.f32 %v126, 0.0
    %v168 = vmax.f32 %v155, 0.0
    %v169 = vmax.f32 %v100, 0.0
    %v170 = vmax.f32 %v129, 0.0
    %v171 = vmax.f32 %v158, 0.0
    %v172 = vmax.f32 %v103, 0.0
    %v173 = vmax.f32 %v132, 0.0
    %v174 = vmax.f32 %v161, 0.0
    %v175 = vld [vmem:[%s3] sm:$0xff]
    %v176 = vld [vmem:[%s3 + $0x8] sm:$0xff]
    %v177 = vld [vmem:[%s4] sm:$0xff]
    %v178 = vld [vmem:[%s4 + $0x8] sm:$0xff]
    %180 = vset.pattern.permute.xlu0 0
    %181 = vperm.xlu0 %180, %v177
    %v182 = vpop.permute.xlu0 %181
    %185 = vset.pattern.permute.xlu0 0
    %186 = vperm.xlu0 %185, %v178
    %v187 = vpop.permute.xlu0 %186
    %vm189 = vcmask 261120
    %v191 = vsel %vm189, %v175, 0
    %v194 = vsel %vm189, %v176, 0
    %196 = vmatpush.msra.mxu0 0.0
    %197 = vmatpush.msra.mxu0 0.0
    %198 = vmatpush.msra.mxu0 0.0
    %199 = vmatpush.msra.mxu0 0.0
    %200 = vmatpush.msra.mxu0 0.0
    %201 = vmatpush.msra.mxu0 0.0
    %202 = vmatpush.msra.mxu0 0.0
    %203 = vmatpush.msra.mxu0 0.0
    %204 = vmatpush.msra.mxu0 0.0
    %205 = vmatpush.msra.mxu0 0.0
    %206 = vmatpush.msra.mxu0 0.0
    %207 = vmatpush.msra.mxu0 0.0
    %208 = vmatpush.msra.mxu0 %v172
    %209 = vmatpush.msra.mxu0 %v169
    %210 = vmatpush.msra.mxu0 %v166
    %211 = vmatpush.msra.mxu0 %v163
    %212 = vmatmul.f32.gmra.mxu0 %v191
    %v213 = vpop.f32.mrf.mxu0
    %v214 = vadd.f32 %v182, %v213
    %215 = vmatmul.f32.gmra.mxu0 %v194
    %v216 = vpop.f32.mrf.mxu0
    %v217 = vadd.f32 %v187, %v216
    %218 = vdwg.mxu0
    %219 = vmatpush.msra.mxu0 0.0
    %220 = vmatpush.msra.mxu0 0.0
    %221 = vmatpush.msra.mxu0 0.0
    %222 = vmatpush.msra.mxu0 0.0
    %223 = vmatpush.msra.mxu0 0.0
    %224 = vmatpush.msra.mxu0 0.0
    %225 = vmatpush.msra.mxu0 0.0
    %226 = vmatpush.msra.mxu0 0.0
    %227 = vmatpush.msra.mxu0 0.0
    %228 = vmatpush.msra.mxu0 0.0
    %229 = vmatpush.msra.mxu0 0.0
    %230 = vmatpush.msra.mxu0 0.0
    %231 = vmatpush.msra.mxu0 %v173
    %232 = vmatpush.msra.mxu0 %v170
    %233 = vmatpush.msra.mxu0 %v167
    %234 = vmatpush.msra.mxu0 %v164
    %235 = vmatmul.f32.gmra.mxu0 %v191
    %v236 = vpop.f32.mrf.mxu0
    %v237 = vadd.f32 %v182, %v236
    %238 = vmatmul.f32.gmra.mxu0 %v194
    %v239 = vpop.f32.mrf.mxu0
    %v240 = vadd.f32 %v187, %v239
    %241 = vdwg.mxu0
    %242 = vmatpush.msra.mxu0 0.0
    %243 = vmatpush.msra.mxu0 0.0
    %244 = vmatpush.msra.mxu0 0.0
    %245 = vmatpush.msra.mxu0 0.0
    %246 = vmatpush.msra.mxu0 0.0
    %247 = vmatpush.msra.mxu0 0.0
    %248 = vmatpush.msra.mxu0 0.0
    %249 = vmatpush.msra.mxu0 0.0
    %250 = vmatpush.msra.mxu0 0.0
    %251 = vmatpush.msra.mxu0 0.0
    %252 = vmatpush.msra.mxu0 0.0
    %253 = vmatpush.msra.mxu0 0.0
    %254 = vmatpush.msra.mxu0 %v174
    %255 = vmatpush.msra.mxu0 %v171
    %256 = vmatpush.msra.mxu0 %v168
    %257 = vmatpush.msra.mxu0 %v165
    %258 = vmatmul.f32.gmra.mxu0 %v191
    %v259 = vpop.f32.mrf.mxu0
    %v260 = vadd.f32 %v182, %v259
    %261 = vmatmul.f32.gmra.mxu0 %v194
    %v262 = vpop.f32.mrf.mxu0
    %v263 = vadd.f32 %v187, %v262
    %264 = vdwg.mxu0
    %v265 = vmax.f32 %v214, 0.0
    %v266 = vmax.f32 %v237, 0.0
    %v267 = vmax.f32 %v260, 0.0
    %v268 = vmax.f32 %v217, 0.0
    %v269 = vmax.f32 %v240, 0.0
    %v270 = vmax.f32 %v263, 0.0
    %v271 = vld [vmem:[%s5] sm:$0x1]
    %v272 = vld [vmem:[#allocation2] sm:$0x1]
    %274 = vset.pattern.permute.xlu0 0
    %275 = vperm.xlu0 %274, %v272
    %v276 = vpop.permute.xlu0 %275
    %v278 = vperm.slane %v276, 0
    %v280 = vsel %vm63, %v271, 0
    %282 = vmatpush.msra.mxu0 0.0
    %283 = vmatpush.msra.mxu0 0.0
    %284 = vmatpush.msra.mxu0 0.0
    %285 = vmatpush.msra.mxu0 0.0
    %286 = vmatpush.msra.mxu0 0.0
    %287 = vmatpush.msra.mxu0 0.0
    %288 = vmatpush.msra.mxu0 0.0
    %289 = vmatpush.msra.mxu0 0.0
    %290 = vmatpush.msra.mxu0 0.0
    %291 = vmatpush.msra.mxu0 0.0
    %292 = vmatpush.msra.mxu0 0.0
    %293 = vmatpush.msra.mxu0 0.0
    %294 = vmatpush.msra.mxu0 0.0
    %295 = vmatpush.msra.mxu0 0.0
    %296 = vmatpush.msra.mxu0 %v268
    %297 = vmatpush.msra.mxu0 %v265
    %298 = vmatmul.f32.gmra.mxu0 %v280
    %v299 = vpop.f32.mrf.mxu0
    %v300 = vadd.f32 %v278, %v299
    %301 = vdwg.mxu0
    %302 = vmatpush.msra.mxu0 0.0
    %303 = vmatpush.msra.mxu0 0.0
    %304 = vmatpush.msra.mxu0 0.0
    %305 = vmatpush.msra.mxu0 0.0
    %306 = vmatpush.msra.mxu0 0.0
    %307 = vmatpush.msra.mxu0 0.0
    %308 = vmatpush.msra.mxu0 0.0
    %309 = vmatpush.msra.mxu0 0.0
    %310 = vmatpush.msra.mxu0 0.0
    %311 = vmatpush.msra.mxu0 0.0
    %312 = vmatpush.msra.mxu0 0.0
    %313 = vmatpush.msra.mxu0 0.0
    %314 = vmatpush.msra.mxu0 0.0
    %315 = vmatpush.msra.mxu0 0.0
    %316 = vmatpush.msra.mxu0 %v269
    %317 = vmatpush.msra.mxu0 %v266
    %318 = vmatmul.f32.gmra.mxu0 %v280
    %v319 = vpop.f32.mrf.mxu0
    %v320 = vadd.f32 %v278, %v319
    %321 = vdwg.mxu0
    %322 = vmatpush.msra.mxu0 0.0
    %323 = vmatpush.msra.mxu0 0.0
    %324 = vmatpush.msra.mxu0 0.0
    %325 = vmatpush.msra.mxu0 0.0
    %326 = vmatpush.msra.mxu0 0.0
    %327 = vmatpush.msra.mxu0 0.0
    %328 = vmatpush.msra.mxu0 0.0
    %329 = vmatpush.msra.mxu0 0.0
    %330 = vmatpush.msra.mxu0 0.0
    %331 = vmatpush.msra.mxu0 0.0
    %332 = vmatpush.msra.mxu0 0.0
    %333 = vmatpush.msra.mxu0 0.0
    %334 = vmatpush.msra.mxu0 0.0
    %335 = vmatpush.msra.mxu0 0.0
    %336 = vmatpush.msra.mxu0 %v270
    %337 = vmatpush.msra.mxu0 %v267
    %338 = vmatmul.f32.gmra.mxu0 %v280
    %v339 = vpop.f32.mrf.mxu0
    %v340 = vadd.f32 %v278, %v339
    %341 = vdwg.mxu0
    %v345 = vrot.slane %v320, 7
    %v346 = vrot.slane %v340, 6
    %vm347 = vcmask 1040384
    %v348 = vsel %vm347, %v300, %v345
    %vm349 = vcmask 1041408
    %v350 = vsel %vm349, %v348, %v346
    %v352 = vlaneseq
    %vm353 = vcmp.ge.s32.totalorder %v352, 0
    %vm354 = vcmp.lt.s32.totalorder %v352, 384
    %vm355 = vmand %vm353, %vm354
    %356 = vst.msk [vmem:[#allocation3] sm:$0x7] %vm355, %v350
    // Predicated region
    $region30: #{tpu_custom_call.1} parent=1 // pred_check
      _
    $region31: #{tpu_custom_call.1} parent=1 // pred_check_branch
      %358 = sbr.rel (0) target = $region33
    $region32: #{tpu_custom_call.1} parent=1 // pred_region
      %360 = vsyncadd [#allocation4], 0
      %s362 = sshll.u32 [#allocation3], 4
      %s363 = int_to_ptr.vmem [resolvable:$true] %s362
      %s364 = sshll.u32 %s7, 4
      %s365 = int_to_ptr.hbm [resolvable:$true] %s364
      %367 = dma.vmem_to_hbm [thread:$0]  %s363, 48, %s365, [#allocation4]
    $region33: #{tpu_custom_call.1} parent=1 // pred_fallthru
      _
    // Predicated region
    $region34: #{tpu_custom_call.1} parent=1 // pred_check
      _
    $region35: #{tpu_custom_call.1} parent=1 // pred_check_branch
      %369 = sbr.rel (0) target = $region37
    $region36: #{tpu_custom_call.1} parent=1 // pred_region
      %371 = dma.done [#allocation4], 48
    $region37: #{tpu_custom_call.1} parent=1 // pred_fallthru
      _
    %372 = vsyncpa [#allocation4], 1

</llo_original>
